<compile_context>
chip_gen: v7x
topology: tpu7x:2x2x1
jax: 0.10.0
libtpu: 0.0.40
codegen_flags: <defaults>
</compile_context>

<pallas_src>
import functools
from typing import NamedTuple

import jax
import jax.numpy as jnp
from jax.experimental import pallas as pl
from jax.experimental.pallas import tpu as pltpu

EPS = 1e-5       # PyTorch nn.LayerNorm default
LANE = 128
SUBLANE = 8


# ------------------------------------------------------------ small helpers --

def _round_up(n, m):
    return (n + m - 1) // m * m


def _pad2(a, shape, dtype=jnp.float32):
    """Zero-pad array `a` up to `shape` (same rank)."""
    out = jnp.zeros(shape, jnp.float32)
    out = out.at[tuple(slice(0, d) for d in a.shape)].set(jnp.asarray(a, jnp.float32))
    return out.astype(dtype)


class Meta(NamedTuple):
    """Static (hashable) kernel configuration."""
    layer_n: int
    obs_dim: int
    hidden: int
    out_dim: int
    hid_p: int
    out_p: int
    n_h: int                 # number of fc2 clones actually used (layer_N - 1)
    use_feature_norm: bool
    compute_fcn: bool        # False when out_dim == 1 (LN over 1 feature == beta exactly)
    matmul_dtype: str


# ------------------------------------------------------------ kernel pieces --

def _ln_padded(h, gamma, beta, d_real):
    """LayerNorm over the last axis where columns [d_real:] of h are exactly zero.

    Two-pass (E[(x-mean)^2]) statistics with an exact correction for the zero
    padded lanes; gamma/beta are zero in padded lanes so padded output columns
    stay exactly 0 and never contaminate the next matmul.
    """
    d_pad = h.shape[-1]
    inv_d = 1.0 / float(d_real)
    mean = jnp.sum(h, axis=-1, keepdims=True) * inv_d
    c = h - mean
    ssq = jnp.sum(c * c, axis=-1, keepdims=True)
    if d_pad != d_real:
        # zero padded lanes contribute (d_pad - d_real) * mean^2 to ssq; remove it.
        ssq = ssq - float(d_pad - d_real) * mean * mean
    var = jnp.maximum(ssq * inv_d, 0.0)
    return c * jax.lax.rsqrt(var + EPS) * gamma + beta


def _lin_relu_ln(h, w, b, gamma, beta, d_real):
    """LayerNorm(ReLU(h @ W + b)); matmul operands in W's (bf16) dtype, f32 accum."""
    y = jnp.dot(h.astype(w.dtype), w, preferred_element_type=jnp.float32)
    y = jnp.maximum(y + b, 0.0)
    return _ln_padded(y, gamma, beta, d_real)


def _make_kernel(meta: Meta):
    n_h = meta.n_h

    def kernel(*refs):
        (x_ref, fng_ref, fnb_ref,
         w1_ref, b1_ref, g1_ref, be1_ref,
         w2_ref, b2_ref, g2_ref, be2_ref) = refs[:11]
        if meta.compute_fcn:
            wn_ref, bn_ref, gn_ref, ben_ref = refs[11:15]
            xn1_ref, out_ref = refs[15], refs[16]
        else:
            xn1_ref = refs[11]

        h = x_ref[...].astype(jnp.float32)
        if meta.use_feature_norm:
            h = _ln_padded(h, fng_ref[...], fnb_ref[...], meta.obs_dim)
        # fc1
        h = _lin_relu_ln(h, w1_ref[...], b1_ref[...], g1_ref[...], be1_ref[...],
                         meta.hidden)
        # fc2 clones (static unrolled loop over stacked weights resident in VMEM)
        for i in range(n_h):
            h = _lin_relu_ln(h, w2_ref[i], b2_ref[i], g2_ref[i], be2_ref[i],
                             meta.hidden)
        xn1_ref[...] = h
        # fc_n (only when out_dim > 1; out_dim == 1 is analytically == beta)
        if meta.compute_fcn:
            out_ref[...] = _lin_relu_ln(h, wn_ref[...], bn_ref[...],
                                        gn_ref[...], ben_ref[...], meta.out_dim)
    return kernel


# ----------------------------------------------------- one-time param prep ---

def prepare_params(params, matmul_dtype=jnp.bfloat16):
    """Pad / stack / cast all parameters ONCE.  Returns (meta, tensors)."""
    layer_n = params["layer_N"]
    w1, b1, g1, be1 = params["fc1"]
    obs_dim, hidden = w1.shape
    wn, bn, gn, ben = params["fc_n"]
    out_dim = wn.shape[1]
    use_fn = params["feature_norm"] is not None
    compute_fcn = out_dim > 1  # out_dim == 1: LayerNorm of a single feature == beta

    hid_p = _round_up(hidden, LANE)
    out_p = _round_up(out_dim, LANE)
    n_h = layer_n - 1
    n_h_store = max(n_h, 1)
    mmd = jnp.dtype(matmul_dtype)

    if use_fn:
        fn_g, fn_b = params["feature_norm"]
    else:
        fn_g = jnp.ones((1, obs_dim), jnp.float32)
        fn_b = jnp.zeros((1, obs_dim), jnp.float32)
    fn_g = jnp.asarray(fn_g, jnp.float32).reshape(1, obs_dim)
    fn_b = jnp.asarray(fn_b, jnp.float32).reshape(1, obs_dim)

    w1_p = _pad2(w1, (obs_dim, hid_p), mmd)          # x is NOT lane-padded, so K=obs_dim
    b1_p = _pad2(b1, (1, hid_p))
    g1_p = _pad2(g1, (1, hid_p))
    be1_p = _pad2(be1, (1, hid_p))

    if n_h > 0:
        w2_p = jnp.stack([_pad2(p[0], (hid_p, hid_p), mmd) for p in params["fc2"][:n_h]])
        b2_p = jnp.stack([_pad2(p[1], (1, hid_p)) for p in params["fc2"][:n_h]])
        g2_p = jnp.stack([_pad2(p[2], (1, hid_p)) for p in params["fc2"][:n_h]])
        be2_p = jnp.stack([_pad2(p[3], (1, hid_p)) for p in params["fc2"][:n_h]])
    else:  # fixed kernel signature; never read
        w2_p = jnp.zeros((1, hid_p, hid_p), mmd)
        b2_p = jnp.zeros((1, 1, hid_p), jnp.float32)
        g2_p = jnp.zeros((1, 1, hid_p), jnp.float32)
        be2_p = jnp.zeros((1, 1, hid_p), jnp.float32)

    base = (fn_g, fn_b, w1_p, b1_p, g1_p, be1_p, w2_p, b2_p, g2_p, be2_p)

    if compute_fcn:
        fcn = (_pad2(wn, (hid_p, out_p), mmd), _pad2(bn, (1, out_p)),
               _pad2(gn, (1, out_p)), _pad2(ben, (1, out_p)))
    else:
        # Only the LN beta of fc_n is needed: out == broadcast(beta) exactly.
        fcn = (jnp.asarray(ben, jnp.float32).reshape(1, out_dim),)

    meta = Meta(layer_n=layer_n, obs_dim=obs_dim, hidden=hidden, out_dim=out_dim,
                hid_p=hid_p, out_p=out_p, n_h=n_h, use_feature_norm=use_fn,
                compute_fcn=compute_fcn, matmul_dtype=str(mmd))
    return meta, base + fcn


# ----------------------------------------------------------- fused forward ---

@functools.partial(jax.jit, static_argnums=(0,), static_argnames=("block_batch",))
def mlp_base_forward(meta: Meta, tensors, x, *, block_batch=1024):
    """Fused MLPBase forward. Returns (x, x_n_1) with logical (unpadded) shapes."""
    batch, obs_dim = x.shape
    assert obs_dim == meta.obs_dim
    x = x.astype(jnp.float32)

    # batch tile: multiple of 8 sublanes, divides the padded batch
    tb = _round_up(min(block_batch, _round_up(batch, SUBLANE)), SUBLANE)
    b_pad = _round_up(batch, tb)
    if b_pad != batch:
        x = jnp.pad(x, ((0, b_pad - batch), (0, 0)))
    grid = (b_pad // tb,)

    base = tensors[:10]
    n_h_store = base[6].shape[0]
    hid_p, out_p = meta.hid_p, meta.out_p

    const2 = lambda i: (0, 0)
    const3 = lambda i: (0, 0, 0)
    batch2 = lambda i: (i, 0)

    in_specs = [
        pl.BlockSpec((tb, obs_dim), batch2),            # x (unpadded feature dim)
        pl.BlockSpec((1, obs_dim), const2),             # feature_norm gamma
        pl.BlockSpec((1, obs_dim), const2),             # feature_norm beta
        pl.BlockSpec((obs_dim, hid_p), const2),         # w1
        pl.BlockSpec((1, hid_p), const2),               # b1
        pl.BlockSpec((1, hid_p), const2),               # ln1 gamma
        pl.BlockSpec((1, hid_p), const2),               # ln1 beta
        pl.BlockSpec((n_h_store, hid_p, hid_p), const3),
        pl.BlockSpec((n_h_store, 1, hid_p), const3),
        pl.BlockSpec((n_h_store, 1, hid_p), const3),
        pl.BlockSpec((n_h_store, 1, hid_p), const3),
    ]
    call_args = (x,) + base

    if meta.compute_fcn:
        in_specs += [pl.BlockSpec((hid_p, out_p), const2),
                     pl.BlockSpec((1, out_p), const2),
                     pl.BlockSpec((1, out_p), const2),
                     pl.BlockSpec((1, out_p), const2)]
        call_args = call_args + tensors[10:14]
        out_shape = (jax.ShapeDtypeStruct((b_pad, hid_p), jnp.float32),
                     jax.ShapeDtypeStruct((b_pad, out_p), jnp.float32))
        out_specs = (pl.BlockSpec((tb, hid_p), batch2),
                     pl.BlockSpec((tb, out_p), batch2))
    else:
        out_shape = jax.ShapeDtypeStruct((b_pad, hid_p), jnp.float32)
        out_specs = pl.BlockSpec((tb, hid_p), batch2)

    # cost estimate + VMEM budget
    mm_bytes = jnp.dtype(meta.matmul_dtype).itemsize
    fcn_cols = out_p if meta.compute_fcn else 0
    flops = 2 * b_pad * (obs_dim * hid_p + meta.n_h * hid_p * hid_p + hid_p * fcn_cols)
    trans = b_pad * (int(meta.use_feature_norm) + 1 + meta.n_h + int(meta.compute_fcn))
    weight_bytes = (obs_dim * hid_p + n_h_store * hid_p * hid_p + hid_p * fcn_cols) * mm_bytes
    io_bytes = 4 * b_pad * (obs_dim + hid_p + fcn_cols) + weight_bytes
    cost = pl.CostEstimate(flops=flops, transcendentals=trans, bytes_accessed=io_bytes)

    act_buf = 2 * tb * (obs_dim + hid_p + fcn_cols) * 4      # double-buffered streams
    vmem_limit = int(min(max(2 * (weight_bytes + act_buf) + (4 << 20), 8 << 20), 48 << 20))

    res = pl.pallas_call(
        _make_kernel(meta),
        grid=grid,
        in_specs=in_specs,
        out_specs=out_specs,
        out_shape=out_shape,
        compiler_params=pltpu.CompilerParams(
            dimension_semantics=("parallel",),     # batch axis -> megacore on v7x
            vmem_limit_bytes=vmem_limit),
        cost_estimate=cost,
    )(*call_args)

    if meta.compute_fcn:
        xn1_pad, out_pad = res
        out = out_pad[:batch, :meta.out_dim]
    else:
        xn1_pad = res
        out_beta = tensors[10]                      # (1, out_dim)
        out = jnp.broadcast_to(out_beta, (batch, meta.out_dim))

    return out, xn1_pad[:batch, :meta.hidden]


# -------------------------------------------------------------- parameters ---

def make_linear_block_params(key, in_dim, out_dim):
    """Weights for one Sequential(Linear, ReLU, LayerNorm) block.

    Deterministic synthetic init (the orthogonal/xavier init of the original
    code is a training-time detail); bias=0, LN gamma=1, LN beta=0 match PyTorch."""
    w = jax.random.normal(key, (in_dim, out_dim), jnp.float32) * (1.0 / jnp.sqrt(in_dim))
    b = jnp.zeros((1, out_dim), jnp.float32)
    gamma = jnp.ones((1, out_dim), jnp.float32)
    beta = jnp.zeros((1, out_dim), jnp.float32)
    return (w, b, gamma, beta)


def make_mlp_base_params(key, obs_dim, hidden_size, layer_n, out_dim,
                         use_feature_normalization):
    keys = jax.random.split(key, 2 + max(layer_n, 1))
    params = {}
    if use_feature_normalization:
        params["feature_norm"] = (jnp.ones((1, obs_dim), jnp.float32),
                                  jnp.zeros((1, obs_dim), jnp.float32))
    else:
        params["feature_norm"] = None
    params["fc1"] = make_linear_block_params(keys[0], obs_dim, hidden_size)
    # fc2 = get_clones(fc_h, layer_N): layer_N independent blocks; forward() uses
    # only layer_N - 1 of them.
    params["fc2"] = [make_linear_block_params(keys[1 + i], hidden_size, hidden_size)
                     for i in range(layer_n)]
    params["fc_n"] = make_linear_block_params(keys[1 + layer_n], hidden_size, out_dim)
    params["layer_N"] = layer_n
    return params


# ------------------------------------------------------ pure-JAX reference ---

def _ref_ln(h, g, b):
    m = jnp.mean(h, axis=-1, keepdims=True)
    v = jnp.mean(jnp.square(h - m), axis=-1, keepdims=True)
    return (h - m) / jnp.sqrt(v + EPS) * g + b


def ref_forward(params, x, matmul_dtype=jnp.float32):
    def dot(a, w):
        return jnp.dot(a.astype(matmul_dtype), w.astype(matmul_dtype),
                       preferred_element_type=jnp.float32)

    def blk(h, p):
        w, b, g, be = p
        return _ref_ln(jnp.maximum(dot(h, w) + b, 0.0), g, be)

    h = x.astype(jnp.float32)
    if params["feature_norm"] is not None:
        h = _ref_ln(h, *params["feature_norm"])
    h = blk(h, params["fc1"])
    for i in range(params["layer_N"] - 1):
        h = blk(h, params["fc2"][i])
    x_n_1 = h
    h = blk(h, params["fc_n"])
    return h, x_n_1


# --------------------------------------------------------------------- main --

if __name__ == "__main__":
    # args-equivalent hyperparameters
    use_feature_normalization = True
    use_orthogonal = True
    layer_N = 2
    hidden_size = 64
    obs_dim = 32
    batch = 8

    # Faithful to the upstream positional-arg bug: out_dim == use_orthogonal (True -> 1).
    out_dim = int(use_orthogonal)

    key = jax.random.PRNGKey(0)
    pkey, xkey, xkey2 = jax.random.split(key, 3)
    params = make_mlp_base_params(pkey, obs_dim, hidden_size, layer_N, out_dim,
                                  use_feature_normalization)
    x = jax.random.normal(xkey, (batch, obs_dim), jnp.float32)

    # one-time parameter preparation (padding / stacking / bf16 cast hoisted here)
    meta, tensors = prepare_params(params, matmul_dtype=jnp.bfloat16)

    out, x_n_1 = mlp_base_forward(meta, tensors, x)
    jax.block_until_ready((out, x_n_1))

    assert out.shape == (batch, out_dim), out.shape
    assert x_n_1.shape == (batch, hidden_size), x_n_1.shape
    assert jnp.all(jnp.isfinite(out)) and jnp.all(jnp.isfinite(x_n_1))

    # Correctness vs a reference that uses the same bf16-operand matmuls (tight),
    # and vs the pure-f32 PyTorch-equivalent reference (loose, bf16 quantization).
    ref_out_bf, ref_xn1_bf = ref_forward(params, x, matmul_dtype=jnp.bfloat16)
    assert jnp.allclose(out, ref_out_bf, atol=1e-2, rtol=1e-2)
    assert jnp.allclose(x_n_1, ref_xn1_bf, atol=1e-2, rtol=1e-2)
    ref_out_f32, ref_xn1_f32 = ref_forward(params, x)
    assert jnp.allclose(out, ref_out_f32, atol=6e-2, rtol=6e-2)
    assert jnp.allclose(x_n_1, ref_xn1_f32, atol=6e-2, rtol=6e-2)

    # Larger, non-multiple batch exercising the batch grid (tb=128, grid=(3,), padded rows).
    batch2 = 300
    x2 = jax.random.normal(xkey2, (batch2, obs_dim), jnp.float32)
    out2, xn1_2 = mlp_base_forward(meta, tensors, x2, block_batch=128)
    jax.block_until_ready((out2, xn1_2))
    assert out2.shape == (batch2, out_dim) and xn1_2.shape == (batch2, hidden_size)
    ref_out2, ref_xn1_2 = ref_forward(params, x2, matmul_dtype=jnp.bfloat16)
    assert jnp.allclose(out2, ref_out2, atol=1e-2, rtol=1e-2)
    assert jnp.allclose(xn1_2, ref_xn1_2, atol=1e-2, rtol=1e-2)

    print("KERNEL_OK")
</pallas_src>

<mosaic_0001>
module attributes {stable_mosaic.version = 11 : i64} {
  func.func @kernel(%arg0: i32, %arg1: memref<8x32xf32, #tpu.memory_space<vmem>>, %arg2: memref<1x32xf32, #tpu.memory_space<vmem>>, %arg3: memref<1x32xf32, #tpu.memory_space<vmem>>, %arg4: memref<32x128xbf16, #tpu.memory_space<vmem>>, %arg5: memref<1x128xf32, #tpu.memory_space<vmem>>, %arg6: memref<1x128xf32, #tpu.memory_space<vmem>>, %arg7: memref<1x128xf32, #tpu.memory_space<vmem>>, %arg8: memref<1x128x128xbf16, #tpu.memory_space<vmem>>, %arg9: memref<1x1x128xf32, #tpu.memory_space<vmem>>, %arg10: memref<1x1x128xf32, #tpu.memory_space<vmem>>, %arg11: memref<1x1x128xf32, #tpu.memory_space<vmem>>, %arg12: memref<8x128xf32, #tpu.memory_space<vmem>>) attributes {dimension_semantics = [#tpu.dimension_semantics<parallel>], iteration_bounds = array<i64: 1>, scalar_prefetch = 0 : i64, scratch_operands = 0 : i64, tpu.core_type = #tpu.core_type<tc>, window_params = [{transform_indices = @transform_0, window_bounds = array<i64: 8, 32>}, {pipeline_mode = #tpu.pipeline_mode<synchronous>, transform_indices = @transform_1, window_bounds = array<i64: 1, 32>}, {pipeline_mode = #tpu.pipeline_mode<synchronous>, transform_indices = @transform_2, window_bounds = array<i64: 1, 32>}, {pipeline_mode = #tpu.pipeline_mode<synchronous>, transform_indices = @transform_3, window_bounds = array<i64: 32, 128>}, {pipeline_mode = #tpu.pipeline_mode<synchronous>, transform_indices = @transform_4, window_bounds = array<i64: 1, 128>}, {pipeline_mode = #tpu.pipeline_mode<synchronous>, transform_indices = @transform_5, window_bounds = array<i64: 1, 128>}, {pipeline_mode = #tpu.pipeline_mode<synchronous>, transform_indices = @transform_6, window_bounds = array<i64: 1, 128>}, {pipeline_mode = #tpu.pipeline_mode<synchronous>, transform_indices = @transform_7, window_bounds = array<i64: 1, 128, 128>}, {pipeline_mode = #tpu.pipeline_mode<synchronous>, transform_indices = @transform_8, window_bounds = array<i64: 1, 1, 128>}, {pipeline_mode = #tpu.pipeline_mode<synchronous>, transform_indices = @transform_9, window_bounds = array<i64: 1, 1, 128>}, {pipeline_mode = #tpu.pipeline_mode<synchronous>, transform_indices = @transform_10, window_bounds = array<i64: 1, 1, 128>}, {transform_indices = @transform_11, window_bounds = array<i64: 8, 128>}]} {
    %c0 = arith.constant 0 : index
    %c0_0 = arith.constant 0 : index
    %0 = vector.load %arg1[%c0, %c0_0] : memref<8x32xf32, #tpu.memory_space<vmem>>, vector<8x32xf32>
    %c0_1 = arith.constant 0 : index
    %c0_2 = arith.constant 0 : index
    %1 = vector.load %arg2[%c0_1, %c0_2] : memref<1x32xf32, #tpu.memory_space<vmem>>, vector<1x32xf32>
    %c0_3 = arith.constant 0 : index
    %c0_4 = arith.constant 0 : index
    %2 = vector.load %arg3[%c0_3, %c0_4] : memref<1x32xf32, #tpu.memory_space<vmem>>, vector<1x32xf32>
    %cst = arith.constant dense<0.000000e+00> : vector<8xf32>
    %3 = vector.multi_reduction <add>, %0, %cst [1] : vector<8x32xf32> to vector<8xf32>
    %4 = vector.shape_cast %3 : vector<8xf32> to vector<8x1xf32>
    %cst_5 = arith.constant 3.125000e-02 : f32
    %5 = vector.broadcast %cst_5 : f32 to vector<8x1xf32>
    %6 = arith.mulf %4, %5 : vector<8x1xf32>
    %7 = vector.broadcast %6 : vector<8x1xf32> to vector<8x32xf32>
    %8 = arith.subf %0, %7 : vector<8x32xf32>
    %9 = arith.mulf %8, %8 : vector<8x32xf32>
    %cst_6 = arith.constant dense<0.000000e+00> : vector<8xf32>
    %10 = vector.multi_reduction <add>, %9, %cst_6 [1] : vector<8x32xf32> to vector<8xf32>
    %11 = vector.shape_cast %10 : vector<8xf32> to vector<8x1xf32>
    %cst_7 = arith.constant 3.125000e-02 : f32
    %12 = vector.broadcast %cst_7 : f32 to vector<8x1xf32>
    %13 = arith.mulf %11, %12 : vector<8x1xf32>
    %cst_8 = arith.constant 0.000000e+00 : f32
    %14 = vector.broadcast %cst_8 : f32 to vector<8x1xf32>
    %15 = arith.maximumf %13, %14 : vector<8x1xf32>
    %cst_9 = arith.constant 9.99999974E-6 : f32
    %16 = vector.broadcast %cst_9 : f32 to vector<8x1xf32>
    %17 = arith.addf %15, %16 : vector<8x1xf32>
    %18 = math.rsqrt %17 : vector<8x1xf32>
    %19 = vector.broadcast %18 : vector<8x1xf32> to vector<8x32xf32>
    %20 = arith.mulf %8, %19 : vector<8x32xf32>
    %21 = vector.broadcast %1 : vector<1x32xf32> to vector<8x32xf32>
    %22 = arith.mulf %20, %21 : vector<8x32xf32>
    %23 = vector.broadcast %2 : vector<1x32xf32> to vector<8x32xf32>
    %24 = arith.addf %22, %23 : vector<8x32xf32>
    %c0_10 = arith.constant 0 : index
    %c0_11 = arith.constant 0 : index
    %25 = vector.load %arg4[%c0_10, %c0_11] : memref<32x128xbf16, #tpu.memory_space<vmem>>, vector<32x128xbf16>
    %c0_12 = arith.constant 0 : index
    %c0_13 = arith.constant 0 : index
    %26 = vector.load %arg5[%c0_12, %c0_13] : memref<1x128xf32, #tpu.memory_space<vmem>>, vector<1x128xf32>
    %c0_14 = arith.constant 0 : index
    %c0_15 = arith.constant 0 : index
    %27 = vector.load %arg6[%c0_14, %c0_15] : memref<1x128xf32, #tpu.memory_space<vmem>>, vector<1x128xf32>
    %c0_16 = arith.constant 0 : index
    %c0_17 = arith.constant 0 : index
    %28 = vector.load %arg7[%c0_16, %c0_17] : memref<1x128xf32, #tpu.memory_space<vmem>>, vector<1x128xf32>
    %29 = arith.truncf %24 : vector<8x32xf32> to vector<8x32xbf16>
    %cst_18 = arith.constant dense<0.000000e+00> : vector<8x128xf32>
    %30 = tpu.matmul %29, %25, %cst_18 {dimension_numbers = #tpu.dot_dimension_numbers<[1], [0], [0], [1], [0, 0, 1, 1], [], []>} : vector<8x32xbf16>, vector<32x128xbf16>, vector<8x128xf32> -> vector<8x128xf32>
    %31 = vector.broadcast %26 : vector<1x128xf32> to vector<8x128xf32>
    %32 = arith.addf %30, %31 : vector<8x128xf32>
    %cst_19 = arith.constant 0.000000e+00 : f32
    %33 = vector.broadcast %cst_19 : f32 to vector<8x128xf32>
    %34 = arith.maximumf %32, %33 : vector<8x128xf32>
    %cst_20 = arith.constant dense<0.000000e+00> : vector<8xf32>
    %35 = vector.multi_reduction <add>, %34, %cst_20 [1] : vector<8x128xf32> to vector<8xf32>
    %36 = vector.shape_cast %35 : vector<8xf32> to vector<8x1xf32>
    %cst_21 = arith.constant 1.562500e-02 : f32
    %37 = vector.broadcast %cst_21 : f32 to vector<8x1xf32>
    %38 = arith.mulf %36, %37 : vector<8x1xf32>
    %39 = vector.broadcast %38 : vector<8x1xf32> to vector<8x128xf32>
    %40 = arith.subf %34, %39 : vector<8x128xf32>
    %41 = arith.mulf %40, %40 : vector<8x128xf32>
    %cst_22 = arith.constant dense<0.000000e+00> : vector<8xf32>
    %42 = vector.multi_reduction <add>, %41, %cst_22 [1] : vector<8x128xf32> to vector<8xf32>
    %43 = vector.shape_cast %42 : vector<8xf32> to vector<8x1xf32>
    %cst_23 = arith.constant 6.400000e+01 : f32
    %44 = vector.broadcast %cst_23 : f32 to vector<8x1xf32>
    %45 = arith.mulf %44, %38 : vector<8x1xf32>
    %46 = arith.mulf %45, %38 : vector<8x1xf32>
    %47 = arith.subf %43, %46 : vector<8x1xf32>
    %cst_24 = arith.constant 1.562500e-02 : f32
    %48 = vector.broadcast %cst_24 : f32 to vector<8x1xf32>
    %49 = arith.mulf %47, %48 : vector<8x1xf32>
    %cst_25 = arith.constant 0.000000e+00 : f32
    %50 = vector.broadcast %cst_25 : f32 to vector<8x1xf32>
    %51 = arith.maximumf %49, %50 : vector<8x1xf32>
    %cst_26 = arith.constant 9.99999974E-6 : f32
    %52 = vector.broadcast %cst_26 : f32 to vector<8x1xf32>
    %53 = arith.addf %51, %52 : vector<8x1xf32>
    %54 = math.rsqrt %53 : vector<8x1xf32>
    %55 = vector.broadcast %54 : vector<8x1xf32> to vector<8x128xf32>
    %56 = arith.mulf %40, %55 : vector<8x128xf32>
    %57 = vector.broadcast %27 : vector<1x128xf32> to vector<8x128xf32>
    %58 = arith.mulf %56, %57 : vector<8x128xf32>
    %59 = vector.broadcast %28 : vector<1x128xf32> to vector<8x128xf32>
    %60 = arith.addf %58, %59 : vector<8x128xf32>
    %c0_27 = arith.constant 0 : index
    %c0_28 = arith.constant 0 : index
    %c0_29 = arith.constant 0 : index
    %61 = vector.load %arg8[%c0_27, %c0_28, %c0_29] : memref<1x128x128xbf16, #tpu.memory_space<vmem>>, vector<1x128x128xbf16>
    %62 = vector.shape_cast %61 : vector<1x128x128xbf16> to vector<128x128xbf16>
    %c0_30 = arith.constant 0 : index
    %c0_31 = arith.constant 0 : index
    %c0_32 = arith.constant 0 : index
    %63 = vector.load %arg9[%c0_30, %c0_31, %c0_32] : memref<1x1x128xf32, #tpu.memory_space<vmem>>, vector<1x1x128xf32>
    %64 = vector.shape_cast %63 : vector<1x1x128xf32> to vector<1x128xf32>
    %c0_33 = arith.constant 0 : index
    %c0_34 = arith.constant 0 : index
    %c0_35 = arith.constant 0 : index
    %65 = vector.load %arg10[%c0_33, %c0_34, %c0_35] : memref<1x1x128xf32, #tpu.memory_space<vmem>>, vector<1x1x128xf32>
    %66 = vector.shape_cast %65 : vector<1x1x128xf32> to vector<1x128xf32>
    %c0_36 = arith.constant 0 : index
    %c0_37 = arith.constant 0 : index
    %c0_38 = arith.constant 0 : index
    %67 = vector.load %arg11[%c0_36, %c0_37, %c0_38] : memref<1x1x128xf32, #tpu.memory_space<vmem>>, vector<1x1x128xf32>
    %68 = vector.shape_cast %67 : vector<1x1x128xf32> to vector<1x128xf32>
    %69 = arith.truncf %60 : vector<8x128xf32> to vector<8x128xbf16>
    %cst_39 = arith.constant dense<0.000000e+00> : vector<8x128xf32>
    %70 = tpu.matmul %69, %62, %cst_39 {dimension_numbers = #tpu.dot_dimension_numbers<[1], [0], [0], [1], [0, 0, 1, 1], [], []>} : vector<8x128xbf16>, vector<128x128xbf16>, vector<8x128xf32> -> vector<8x128xf32>
    %71 = vector.broadcast %64 : vector<1x128xf32> to vector<8x128xf32>
    %72 = arith.addf %70, %71 : vector<8x128xf32>
    %cst_40 = arith.constant 0.000000e+00 : f32
    %73 = vector.broadcast %cst_40 : f32 to vector<8x128xf32>
    %74 = arith.maximumf %72, %73 : vector<8x128xf32>
    %cst_41 = arith.constant dense<0.000000e+00> : vector<8xf32>
    %75 = vector.multi_reduction <add>, %74, %cst_41 [1] : vector<8x128xf32> to vector<8xf32>
    %76 = vector.shape_cast %75 : vector<8xf32> to vector<8x1xf32>
    %cst_42 = arith.constant 1.562500e-02 : f32
    %77 = vector.broadcast %cst_42 : f32 to vector<8x1xf32>
    %78 = arith.mulf %76, %77 : vector<8x1xf32>
    %79 = vector.broadcast %78 : vector<8x1xf32> to vector<8x128xf32>
    %80 = arith.subf %74, %79 : vector<8x128xf32>
    %81 = arith.mulf %80, %80 : vector<8x128xf32>
    %cst_43 = arith.constant dense<0.000000e+00> : vector<8xf32>
    %82 = vector.multi_reduction <add>, %81, %cst_43 [1] : vector<8x128xf32> to vector<8xf32>
    %83 = vector.shape_cast %82 : vector<8xf32> to vector<8x1xf32>
    %cst_44 = arith.constant 6.400000e+01 : f32
    %84 = vector.broadcast %cst_44 : f32 to vector<8x1xf32>
    %85 = arith.mulf %84, %78 : vector<8x1xf32>
    %86 = arith.mulf %85, %78 : vector<8x1xf32>
    %87 = arith.subf %83, %86 : vector<8x1xf32>
    %cst_45 = arith.constant 1.562500e-02 : f32
    %88 = vector.broadcast %cst_45 : f32 to vector<8x1xf32>
    %89 = arith.mulf %87, %88 : vector<8x1xf32>
    %cst_46 = arith.constant 0.000000e+00 : f32
    %90 = vector.broadcast %cst_46 : f32 to vector<8x1xf32>
    %91 = arith.maximumf %89, %90 : vector<8x1xf32>
    %cst_47 = arith.constant 9.99999974E-6 : f32
    %92 = vector.broadcast %cst_47 : f32 to vector<8x1xf32>
    %93 = arith.addf %91, %92 : vector<8x1xf32>
    %94 = math.rsqrt %93 : vector<8x1xf32>
    %95 = vector.broadcast %94 : vector<8x1xf32> to vector<8x128xf32>
    %96 = arith.mulf %80, %95 : vector<8x128xf32>
    %97 = vector.broadcast %66 : vector<1x128xf32> to vector<8x128xf32>
    %98 = arith.mulf %96, %97 : vector<8x128xf32>
    %99 = vector.broadcast %68 : vector<1x128xf32> to vector<8x128xf32>
    %100 = arith.addf %98, %99 : vector<8x128xf32>
    %c0_48 = arith.constant 0 : index
    %c0_49 = arith.constant 0 : index
    %101 = vector.load %arg12[%c0_48, %c0_49] : memref<8x128xf32, #tpu.memory_space<vmem>>, vector<8x128xf32>
    tpu.vector_store %arg12[%c0_48, %c0_49], %100 {strides = array<i32>} : memref<8x128xf32, #tpu.memory_space<vmem>>, vector<8x128xf32>,
    return
  }
  func.func @transform_0(%arg0: i32) -> (i32, i32) {
    %c0_i32 = arith.constant 0 : i32
    %c0_i32_0 = arith.constant 0 : i32
    return %arg0, %c0_i32 : i32, i32
  }
  func.func @transform_1(%arg0: i32) -> (i32, i32) {
    %c0_i32 = arith.constant 0 : i32
    %c0_i32_0 = arith.constant 0 : i32
    %c0_i32_1 = arith.constant 0 : i32
    return %c0_i32, %c0_i32_0 : i32, i32
  }
  func.func @transform_2(%arg0: i32) -> (i32, i32) {
    %c0_i32 = arith.constant 0 : i32
    %c0_i32_0 = arith.constant 0 : i32
    %c0_i32_1 = arith.constant 0 : i32
    return %c0_i32, %c0_i32_0 : i32, i32
  }
  func.func @transform_3(%arg0: i32) -> (i32, i32) {
    %c0_i32 = arith.constant 0 : i32
    %c0_i32_0 = arith.constant 0 : i32
    %c0_i32_1 = arith.constant 0 : i32
    return %c0_i32, %c0_i32_0 : i32, i32
  }
  func.func @transform_4(%arg0: i32) -> (i32, i32) {
    %c0_i32 = arith.constant 0 : i32
    %c0_i32_0 = arith.constant 0 : i32
    %c0_i32_1 = arith.constant 0 : i32
    return %c0_i32, %c0_i32_0 : i32, i32
  }
  func.func @transform_5(%arg0: i32) -> (i32, i32) {
    %c0_i32 = arith.constant 0 : i32
    %c0_i32_0 = arith.constant 0 : i32
    %c0_i32_1 = arith.constant 0 : i32
    return %c0_i32, %c0_i32_0 : i32, i32
  }
  func.func @transform_6(%arg0: i32) -> (i32, i32) {
    %c0_i32 = arith.constant 0 : i32
    %c0_i32_0 = arith.constant 0 : i32
    %c0_i32_1 = arith.constant 0 : i32
    return %c0_i32, %c0_i32_0 : i32, i32
  }
  func.func @transform_7(%arg0: i32) -> (i32, i32, i32) {
    %c0_i32 = arith.constant 0 : i32
    %c0_i32_0 = arith.constant 0 : i32
    %c0_i32_1 = arith.constant 0 : i32
    %c0_i32_2 = arith.constant 0 : i32
    return %c0_i32, %c0_i32_0, %c0_i32_1 : i32, i32, i32
  }
  func.func @transform_8(%arg0: i32) -> (i32, i32, i32) {
    %c0_i32 = arith.constant 0 : i32
    %c0_i32_0 = arith.constant 0 : i32
    %c0_i32_1 = arith.constant 0 : i32
    %c0_i32_2 = arith.constant 0 : i32
    return %c0_i32, %c0_i32_0, %c0_i32_1 : i32, i32, i32
  }
  func.func @transform_9(%arg0: i32) -> (i32, i32, i32) {
    %c0_i32 = arith.constant 0 : i32
    %c0_i32_0 = arith.constant 0 : i32
    %c0_i32_1 = arith.constant 0 : i32
    %c0_i32_2 = arith.constant 0 : i32
    return %c0_i32, %c0_i32_0, %c0_i32_1 : i32, i32, i32
  }
  func.func @transform_10(%arg0: i32) -> (i32, i32, i32) {
    %c0_i32 = arith.constant 0 : i32
    %c0_i32_0 = arith.constant 0 : i32
    %c0_i32_1 = arith.constant 0 : i32
    %c0_i32_2 = arith.constant 0 : i32
    return %c0_i32, %c0_i32_0, %c0_i32_1 : i32, i32, i32
  }
  func.func @transform_11(%arg0: i32) -> (i32, i32) {
    %c0_i32 = arith.constant 0 : i32
    %c0_i32_0 = arith.constant 0 : i32
    return %arg0, %c0_i32 : i32, i32
  }
}

</mosaic_0001>

<llo_original>
// kernel: mlp_base_forward.1
$region0: #{mlp_base_forward.1}
  #allocation0 [shape = 'u32[]', space=smem, size = 0x4, offset = 0x4, fixed_abs, tag = 'smem constant byte address 0x4 - core index']
  #allocation1 [shape = 'u32[144,128]{1,0:T(1,128)}', space=vmem, size = 0x12000, scoped, tag = 'internal scratch']
  %s0 = inlined_call_operand.vmem [shape: f32[8,32], index: 0, kind: input, shape index: {}]
  %s1 = inlined_call_operand.vmem [shape: f32[1,32], index: 1, kind: input, shape index: {}]
  %s2 = inlined_call_operand.vmem [shape: f32[1,32], index: 2, kind: input, shape index: {}]
  %s3 = inlined_call_operand.vmem [shape: bf16[32,128], index: 3, kind: input, shape index: {}]
  %s4 = inlined_call_operand.hbm [shape: f32[1,128], index: 4, kind: input, shape index: {}]
  %s5 = inlined_call_operand.hbm [shape: f32[1,128], index: 5, kind: input, shape index: {}]
  %s6 = inlined_call_operand.vmem [shape: f32[1,128], index: 6, kind: input, shape index: {}]
  %s7 = inlined_call_operand.hbm [shape: bf16[1,128,128], index: 7, kind: input, shape index: {}]
  %s8 = inlined_call_operand.vmem [shape: f32[1,1,128], index: 8, kind: input, shape index: {}]
  %s9 = inlined_call_operand.vmem [shape: f32[1,1,128], index: 9, kind: input, shape index: {}]
  %s10 = inlined_call_operand.vmem [shape: f32[1,1,128], index: 10, kind: input, shape index: {}]
  %s11 = inlined_call_operand.hbm [shape: f32[8,128], index: 11, kind: output, shape index: {}]
  %s12 = sld [smem:[#allocation0]]
  $region66: #{mlp_base_forward.1} parent=0
    _
  %s14 = ssub.s32 1, %s12
  %s15 = scalar_select 0, %s14, %s12
  $region1: #{mlp_base_forward.1} parent=0
    #allocation2 [shape = 'u8[512]{0}', space=vmem, size = 0x400, scoped, tag = 'input window, operand 4, single buffered']
    #allocation3 [shape = 's32[1]{0}', space=sflag, size = 0x4, scoped, tag = 'scoped memory for mlp_base_forward.1']
    #allocation4 [shape = 's32[1]{0}', space=sflag, size = 0x4, scoped, tag = 'scoped memory for mlp_base_forward.1']
    #allocation5 [shape = 'u8[512]{0}', space=vmem, size = 0x400, scoped, tag = 'input window, operand 5, single buffered']
    #allocation6 [shape = 's32[1]{0}', space=sflag, size = 0x4, scoped, tag = 'scoped memory for mlp_base_forward.1']
    #allocation7 [shape = 'u8[32768]{0}', space=vmem, size = 0x8000, scoped, tag = 'input window, operand 7, single buffered']
    #allocation8 [shape = 'u8[4096]{0}', space=vmem, size = 0x1000, scoped, tag = 'output window, operand 0, single buffered']
    %16 = vsyncpa [#allocation3], 0
    %17 = vsyncpa [#allocation6], 0
    %18 = vsyncpa [#allocation4], 0
    // Predicated region
    $region2: #{mlp_base_forward.1} parent=1 // pred_check
      _
    $region3: #{mlp_base_forward.1} parent=1 // pred_check_branch
      %20 = sbr.rel (0) target = $region5
    $region4: #{mlp_base_forward.1} parent=1 // pred_region
      _
    $region5: #{mlp_base_forward.1} parent=1 // pred_fallthru
      _
    // Predicated region
    $region6: #{mlp_base_forward.1} parent=1 // pred_check
      _
    $region7: #{mlp_base_forward.1} parent=1 // pred_check_branch
      %22 = sbr.rel (0) target = $region9
    $region8: #{mlp_base_forward.1} parent=1 // pred_region
      _
    $region9: #{mlp_base_forward.1} parent=1 // pred_fallthru
      _
    // Predicated region
    $region10: #{mlp_base_forward.1} parent=1 // pred_check
      _
    $region11: #{mlp_base_forward.1} parent=1 // pred_check_branch
      %24 = sbr.rel (0) target = $region13
    $region12: #{mlp_base_forward.1} parent=1 // pred_region
      _
    $region13: #{mlp_base_forward.1} parent=1 // pred_fallthru
      _
    // Predicated region
    $region14: #{mlp_base_forward.1} parent=1 // pred_check
      _
    $region15: #{mlp_base_forward.1} parent=1 // pred_check_branch
      %26 = sbr.rel (0) target = $region17
    $region16: #{mlp_base_forward.1} parent=1 // pred_region
      _
    $region17: #{mlp_base_forward.1} parent=1 // pred_fallthru
      _
    // Predicated region
    $region18: #{mlp_base_forward.1} parent=1 // pred_check
      _
    $region19: #{mlp_base_forward.1} parent=1 // pred_check_branch
      %28 = sbr.rel (0) target = $region21
    $region20: #{mlp_base_forward.1} parent=1 // pred_region
      %s30 = ssub.s32 16, 16
      %31 = vsyncadd [#allocation3], %s30
      %s33 = sshll.u32 [#allocation2], 4
      %s34 = int_to_ptr.vmem [resolvable:$true] %s33
      %36 = dma.hbm_to_vmem [thread:$0]  %s4, 16, %s34, [#allocation3]
    $region21: #{mlp_base_forward.1} parent=1 // pred_fallthru
      _
    // Predicated region
    $region22: #{mlp_base_forward.1} parent=1 // pred_check
      _
    $region23: #{mlp_base_forward.1} parent=1 // pred_check_branch
      %38 = sbr.rel (0) target = $region25
    $region24: #{mlp_base_forward.1} parent=1 // pred_region
      %s40 = ssub.s32 16, 16
      %41 = vsyncadd [#allocation6], %s40
      %s43 = sshll.u32 [#allocation5], 4
      %s44 = int_to_ptr.vmem [resolvable:$true] %s43
      %46 = dma.hbm_to_vmem [thread:$0]  %s5, 16, %s44, [#allocation6]
    $region25: #{mlp_base_forward.1} parent=1 // pred_fallthru
      _
    // Predicated region
    $region26: #{mlp_base_forward.1} parent=1 // pred_check
      _
    $region27: #{mlp_base_forward.1} parent=1 // pred_check_branch
      %48 = sbr.rel (0) target = $region29
    $region28: #{mlp_base_forward.1} parent=1 // pred_region
      _
    $region29: #{mlp_base_forward.1} parent=1 // pred_fallthru
      _
    // Predicated region
    $region30: #{mlp_base_forward.1} parent=1 // pred_check
      _
    $region31: #{mlp_base_forward.1} parent=1 // pred_check_branch
      %50 = sbr.rel (0) target = $region33
    $region32: #{mlp_base_forward.1} parent=1 // pred_region
      %s52 = ssub.s32 1024, 1024
      %53 = vsyncadd [#allocation6], %s52
      %s54 = sshll.u32 [#allocation7], 4
      %s55 = int_to_ptr.vmem [resolvable:$true] %s54
      %60 = dma.hbm_to_vmem [thread:$0]  %s7, 1024, %s55, [#allocation6], 64, 64, 4
    $region33: #{mlp_base_forward.1} parent=1 // pred_fallthru
      _
    // Predicated region
    $region34: #{mlp_base_forward.1} parent=1 // pred_check
      _
    $region35: #{mlp_base_forward.1} parent=1 // pred_check_branch
      %62 = sbr.rel (0) target = $region37
    $region36: #{mlp_base_forward.1} parent=1 // pred_region
      _
    $region37: #{mlp_base_forward.1} parent=1 // pred_fallthru
      _
    // Predicated region
    $region38: #{mlp_base_forward.1} parent=1 // pred_check
      _
    $region39: #{mlp_base_forward.1} parent=1 // pred_check_branch
      %64 = sbr.rel (0) target = $region41
    $region40: #{mlp_base_forward.1} parent=1 // pred_region
      _
    $region41: #{mlp_base_forward.1} parent=1 // pred_fallthru
      _
    // Predicated region
    $region42: #{mlp_base_forward.1} parent=1 // pred_check
      _
    $region43: #{mlp_base_forward.1} parent=1 // pred_check_branch
      %66 = sbr.rel (0) target = $region45
    $region44: #{mlp_base_forward.1} parent=1 // pred_region
      _
    $region45: #{mlp_base_forward.1} parent=1 // pred_fallthru
      _
    // Predicated region
    $region46: #{mlp_base_forward.1} parent=1 // pred_check
      _
    $region47: #{mlp_base_forward.1} parent=1 // pred_check_branch
      %68 = sbr.rel (0) target = $region49
    $region48: #{mlp_base_forward.1} parent=1 // pred_region
      %69 = dma.done [#allocation3], 16
    $region49: #{mlp_base_forward.1} parent=1 // pred_fallthru
      _
    // Predicated region
    $region50: #{mlp_base_forward.1} parent=1 // pred_check
      _
    $region51: #{mlp_base_forward.1} parent=1 // pred_check_branch
      %71 = sbr.rel (0) target = $region53
    $region52: #{mlp_base_forward.1} parent=1 // pred_region
      %72 = dma.done [#allocation6], 16
    $region53: #{mlp_base_forward.1} parent=1 // pred_fallthru
      _
    // Predicated region
    $region54: #{mlp_base_forward.1} parent=1 // pred_check
      _
    $region55: #{mlp_base_forward.1} parent=1 // pred_check_branch
      %74 = sbr.rel (0) target = $region57
    $region56: #{mlp_base_forward.1} parent=1 // pred_region
      %75 = dma.done [#allocation6], 1024
    $region57: #{mlp_base_forward.1} parent=1 // pred_fallthru
      _
    %v77 = vld [vmem:[%s0] sm:$0xff]
    %v78 = vld [vmem:[%s1] sm:$0x1]
    %v79 = vld [vmem:[%s2] sm:$0x1]
    %vm80 = vcmask 261120
    %v81 = vsel %vm80, %v77, 0.0
    %82 = vadd.xlane.f32.xlu0 %v81
    %v83 = vpop.xlane.xlu0 %82
    %v84 = vmul.f32 %v83, 0.03125
    %v85 = vsub.f32 %v77, %v84
    %v86 = vmul.f32 %v85, %v85
    %v87 = vsel %vm80, %v86, 0.0
    %88 = vadd.xlane.f32.xlu0 %v87
    %v89 = vpop.xlane.xlu0 %88
    %v90 = vmul.f32 %v89, 0.03125
    %v91 = vmax.f32 %v90, 0.0
    %v92 = vadd.f32 %v91, 1e-05
    %v93 = vrsqrt.pop %v92
    %v94 = vmul.f32 %v85, %v93
    %v96 = vlaneseq
    %v97 = vshrl.u32 %v96, 7
    %v98 = vsub.s32 0, %v97
    %v99 = vrot.slane %v78, %v98
    %v101 = vmul.f32 %v94, %v99
    %v103 = vlaneseq
    %v104 = vshrl.u32 %v103, 7
    %v105 = vsub.s32 0, %v104
    %v106 = vrot.slane %v79, %v105
    %v108 = vadd.f32 %v101, %v106
    %v109 = vld [vmem:[%s3] sm:$0xf]
    %v110 = vld [vmem:[%s3 + $0x4] sm:$0xf]
    %v111 = vld [vmem:[%s3 + $0x8] sm:$0xf]
    %v112 = vld [vmem:[%s3 + $0xc] sm:$0xf]
    %v113 = vld [vmem:[#allocation2] sm:$0x1]
    %v114 = vld [vmem:[#allocation5] sm:$0x1]
    %v115 = vld [vmem:[%s6] sm:$0x1]
    %v116 = vpack.c.bf16 %v108, %v108
    %v118 = vlaneseq
    %v119 = vshrl.u32 %v118, 7
    %v120 = vsub.s32 0, %v119
    %v121 = vrot.slane %v113, %v120
    %v127 = vunpack.c.l.b16 %v109
    %v128 = vunpack.c.l.b16 %v110
    %v129 = vunpack.c.l.b16 %v111
    %v130 = vunpack.c.l.b16 %v112
    %v131 = vpack.c.b16 %v128, %v127
    %v132 = vpack.c.b16 %v130, %v129
    %v136 = vsel %vm80, %v116, 0
    %138 = vmatprep.subr.bf16.mxu0 0
    %139 = vmatpush1.bf16.msra.mxu0 %v131
    %140 = vmatprep.subr.bf16.mxu0 0
    %141 = vmatpush1.bf16.msra.mxu0 %v132
    %142 = vmatprep.subr.bf16.mxu0 0
    %143 = vmatpush1.bf16.msra.mxu0 0
    %144 = vmatprep.subr.bf16.mxu0 0
    %145 = vmatpush1.bf16.msra.mxu0 0
    %146 = vmatprep.subr.bf16.mxu0 0
    %147 = vmatpush1.bf16.msra.mxu0 0
    %148 = vmatprep.subr.bf16.mxu0 0
    %149 = vmatpush1.bf16.msra.mxu0 0
    %150 = vmatprep.subr.bf16.mxu0 0
    %151 = vmatpush1.bf16.msra.mxu0 0
    %152 = vmatprep.subr.bf16.mxu0 0
    %153 = vmatpush1.bf16.msra.mxu0 0
    %154 = vmatprep.subr.bf16.mxu0 0
    %155 = vmatpush1.bf16.msra.mxu0 0
    %156 = vmatprep.subr.bf16.mxu0 0
    %157 = vmatpush1.bf16.msra.mxu0 0
    %158 = vmatprep.subr.bf16.mxu0 0
    %159 = vmatpush1.bf16.msra.mxu0 0
    %160 = vmatprep.subr.bf16.mxu0 0
    %161 = vmatpush1.bf16.msra.mxu0 0
    %162 = vmatprep.subr.bf16.mxu0 0
    %163 = vmatpush1.bf16.msra.mxu0 0
    %164 = vmatprep.subr.bf16.mxu0 0
    %165 = vmatpush1.bf16.msra.mxu0 0
    %166 = vmatprep.subr.bf16.mxu0 0
    %167 = vmatpush1.bf16.msra.mxu0 0
    %168 = vmatprep.subr.bf16.mxu0 0
    %169 = vmatpush1.bf16.msra.mxu0 0
    %170 = vmatprep.mubr.bf16.mxu0 0
    %171 = vmatmul.mubr.bf16.gmra.mrb[0].mxu0 %v136
    %v172 = vpop.f32.mrb[0].mxu0
    %v173 = vadd.f32 %v121, %v172
    %v174 = vpop.f32.mrb[0].mxu0
    %v175 = vpop.f32.mrb[0].mxu0
    %v176 = vpop.f32.mrb[0].mxu0
    %177 = vdwg.mxu0
    %v178 = vmax.f32 %v173, 0.0
    %179 = vadd.xlane.f32.xlu0 %v178
    %v180 = vpop.xlane.xlu0 %179
    %v181 = vmul.f32 %v180, 0.015625
    %v182 = vsub.f32 %v178, %v181
    %v183 = vmul.f32 %v182, %v182
    %184 = vadd.xlane.f32.xlu0 %v183
    %v185 = vpop.xlane.xlu0 %184
    %v186 = vmul.f32 %v181, 64.0
    %v187 = vmul.f32 %v186, %v181
    %v188 = vsub.f32 %v185, %v187
    %v189 = vmul.f32 %v188, 0.015625
    %v190 = vmax.f32 %v189, 0.0
    %v191 = vadd.f32 %v190, 1e-05
    %v192 = vrsqrt.pop %v191
    %v193 = vmul.f32 %v182, %v192
    %v195 = vlaneseq
    %v196 = vshrl.u32 %v195, 7
    %v197 = vsub.s32 0, %v196
    %v198 = vrot.slane %v114, %v197
    %v200 = vmul.f32 %v193, %v198
    %v202 = vlaneseq
    %v203 = vshrl.u32 %v202, 7
    %v204 = vsub.s32 0, %v203
    %v205 = vrot.slane %v115, %v204
    %v207 = vadd.f32 %v200, %v205
    %v208 = vld [vmem:[#allocation7] sm:$0xf]
    %v209 = vld [vmem:[#allocation7 + $0x4] sm:$0xf]
    %v210 = vld [vmem:[#allocation7 + $0x8] sm:$0xf]
    %v211 = vld [vmem:[#allocation7 + $0xc] sm:$0xf]
    %v212 = vld [vmem:[#allocation7 + $0x10] sm:$0xf]
    %v213 = vld [vmem:[#allocation7 + $0x14] sm:$0xf]
    %v214 = vld [vmem:[#allocation7 + $0x18] sm:$0xf]
    %v215 = vld [vmem:[#allocation7 + $0x1c] sm:$0xf]
    %v216 = vld [vmem:[#allocation7 + $0x20] sm:$0xf]
    %v217 = vld [vmem:[#allocation7 + $0x24] sm:$0xf]
    %v218 = vld [vmem:[#allocation7 + $0x28] sm:$0xf]
    %v219 = vld [vmem:[#allocation7 + $0x2c] sm:$0xf]
    %v220 = vld [vmem:[#allocation7 + $0x30] sm:$0xf]
    %v221 = vld [vmem:[#allocation7 + $0x34] sm:$0xf]
    %v222 = vld [vmem:[#allocation7 + $0x38] sm:$0xf]
    %v223 = vld [vmem:[#allocation7 + $0x3c] sm:$0xf]
    %v224 = vld [vmem:[%s8] sm:$0x1]
    %v225 = vld [vmem:[%s9] sm:$0x1]
    %v226 = vld [vmem:[%s10] sm:$0x1]
    %v227 = vpack.c.bf16 %v207, %v207
    %v229 = vlaneseq
    %v230 = vshrl.u32 %v229, 7
    %v231 = vsub.s32 0, %v230
    %v232 = vrot.slane %v224, %v231
    %v250 = vunpack.c.l.b16 %v208
    %v251 = vunpack.c.l.b16 %v209
    %v252 = vunpack.c.l.b16 %v210
    %v253 = vunpack.c.l.b16 %v211
    %v254 = vunpack.c.l.b16 %v212
    %v255 = vunpack.c.l.b16 %v213
    %v256 = vunpack.c.l.b16 %v214
    %v257 = vunpack.c.l.b16 %v215
    %v258 = vunpack.c.l.b16 %v216
    %v259 = vunpack.c.l.b16 %v217
    %v260 = vunpack.c.l.b16 %v218
    %v261 = vunpack.c.l.b16 %v219
    %v262 = vunpack.c.l.b16 %v220
    %v263 = vunpack.c.l.b16 %v221
    %v264 = vunpack.c.l.b16 %v222
    %v265 = vunpack.c.l.b16 %v223
    %v266 = vpack.c.b16 %v251, %v250
    %v267 = vpack.c.b16 %v253, %v252
    %v268 = vpack.c.b16 %v255, %v254
    %v269 = vpack.c.b16 %v257, %v256
    %v270 = vpack.c.b16 %v259, %v258
    %v271 = vpack.c.b16 %v261, %v260
    %v272 = vpack.c.b16 %v263, %v262
    %v273 = vpack.c.b16 %v265, %v264
    %282 = vmatprep.subr.bf16.mxu0 0
    %283 = vmatpush1.bf16.msra.mxu0 %v266
    %284 = vmatprep.subr.bf16.mxu0 0
    %285 = vmatpush1.bf16.msra.mxu0 %v267
    %286 = vmatprep.subr.bf16.mxu0 0
    %287 = vmatpush1.bf16.msra.mxu0 %v268
    %288 = vmatprep.subr.bf16.mxu0 0
    %289 = vmatpush1.bf16.msra.mxu0 %v269
    %290 = vmatprep.subr.bf16.mxu0 0
    %291 = vmatpush1.bf16.msra.mxu0 %v270
    %292 = vmatprep.subr.bf16.mxu0 0
    %293 = vmatpush1.bf16.msra.mxu0 %v271
    %294 = vmatprep.subr.bf16.mxu0 0
    %295 = vmatpush1.bf16.msra.mxu0 %v272
    %296 = vmatprep.subr.bf16.mxu0 0
    %297 = vmatpush1.bf16.msra.mxu0 %v273
    %298 = vmatprep.subr.bf16.mxu0 0
    %299 = vmatpush1.bf16.msra.mxu0 0
    %300 = vmatprep.subr.bf16.mxu0 0
    %301 = vmatpush1.bf16.msra.mxu0 0
    %302 = vmatprep.subr.bf16.mxu0 0
    %303 = vmatpush1.bf16.msra.mxu0 0
    %304 = vmatprep.subr.bf16.mxu0 0
    %305 = vmatpush1.bf16.msra.mxu0 0
    %306 = vmatprep.subr.bf16.mxu0 0
    %307 = vmatpush1.bf16.msra.mxu0 0
    %308 = vmatprep.subr.bf16.mxu0 0
    %309 = vmatpush1.bf16.msra.mxu0 0
    %310 = vmatprep.subr.bf16.mxu0 0
    %311 = vmatpush1.bf16.msra.mxu0 0
    %312 = vmatprep.subr.bf16.mxu0 0
    %313 = vmatpush1.bf16.msra.mxu0 0
    %314 = vmatprep.mubr.bf16.mxu0 0
    %315 = vmatmul.mubr.bf16.gmra.mrb[0].mxu0 %v227
    %v316 = vpop.f32.mrb[0].mxu0
    %v317 = vadd.f32 %v232, %v316
    %v318 = vpop.f32.mrb[0].mxu0
    %v319 = vpop.f32.mrb[0].mxu0
    %v320 = vpop.f32.mrb[0].mxu0
    %321 = vdwg.mxu0
    %v322 = vmax.f32 %v317, 0.0
    %323 = vadd.xlane.f32.xlu0 %v322
    %v324 = vpop.xlane.xlu0 %323
    %v325 = vmul.f32 %v324, 0.015625
    %v326 = vsub.f32 %v322, %v325
    %v327 = vmul.f32 %v326, %v326
    %328 = vadd.xlane.f32.xlu0 %v327
    %v329 = vpop.xlane.xlu0 %328
    %v330 = vmul.f32 %v325, 64.0
    %v331 = vmul.f32 %v330, %v325
    %v332 = vsub.f32 %v329, %v331
    %v333 = vmul.f32 %v332, 0.015625
    %v334 = vmax.f32 %v333, 0.0
    %v335 = vadd.f32 %v334, 1e-05
    %v336 = vrsqrt.pop %v335
    %v337 = vmul.f32 %v326, %v336
    %v339 = vlaneseq
    %v340 = vshrl.u32 %v339, 7
    %v341 = vsub.s32 0, %v340
    %v342 = vrot.slane %v225, %v341
    %v344 = vmul.f32 %v337, %v342
    %v346 = vlaneseq
    %v347 = vshrl.u32 %v346, 7
    %v348 = vsub.s32 0, %v347
    %v349 = vrot.slane %v226, %v348
    %v351 = vadd.f32 %v344, %v349
    %352 = vst [vmem:[#allocation8] sm:$0xff] %v351
    // Predicated region
    $region58: #{mlp_base_forward.1} parent=1 // pred_check
      _
    $region59: #{mlp_base_forward.1} parent=1 // pred_check_branch
      %354 = sbr.rel (0) target = $region61
    $region60: #{mlp_base_forward.1} parent=1 // pred_region
      %s356 = ssub.s32 128, 128
      %357 = vsyncadd [#allocation4], %s356
      %s359 = sshll.u32 [#allocation8], 4
      %s360 = int_to_ptr.vmem [resolvable:$true] %s359
      %362 = dma.vmem_to_hbm [thread:$0]  %s360, 128, %s11, [#allocation4]
    $region61: #{mlp_base_forward.1} parent=1 // pred_fallthru
      _
    // Predicated region
    $region62: #{mlp_base_forward.1} parent=1 // pred_check
      _
    $region63: #{mlp_base_forward.1} parent=1 // pred_check_branch
      %364 = sbr.rel (0) target = $region65
    $region64: #{mlp_base_forward.1} parent=1 // pred_region
      %365 = dma.done [#allocation4], 128
    $region65: #{mlp_base_forward.1} parent=1 // pred_fallthru
      _
    %366 = vsyncpa [#allocation3], 1
    %367 = vsyncpa [#allocation6], 1
    %368 = vsyncpa [#allocation4], 1

</llo_original>
